<compile_context>
chip_gen: v5e
topology: v5e:2x2
jax: 0.10.0
libtpu: 0.0.40
codegen_flags: <defaults>
</compile_context>

<pallas_src>
import jax
import jax.numpy as jnp
from jax.experimental import pallas as pl
from jax.experimental.pallas import tpu as pltpu

LANE = 128


def videoclip_kernel(x_ref, wfold_ref, bfold_ref, out_ref):
    # x_ref:     (F, Pp)  f32   flattened frames (lane-padded)
    # wfold_ref: (Pp, Dp) bf16  pre-folded (W_enc @ W_agg) / F, pre-padded
    # bfold_ref: (1, Dp)  f32   pre-folded  b_enc @ W_agg + b_agg
    # out_ref:   (1, Dp)  f32
    #
    # sum over frames (1/F already folded into wfold), then one bf16 MXU GEMV
    # with f32 accumulation, then the f32 bias add.
    sum_x = jnp.sum(x_ref[...], axis=0, keepdims=True)              # (1, Pp) f32
    out_ref[...] = (
        jnp.dot(sum_x.astype(wfold_ref.dtype), wfold_ref[...],
                preferred_element_type=jnp.float32)
        + bfold_ref[...]
    )


def _round_up(n, m):
    return ((n + m - 1) // m) * m


def _pad_axis(x, target, axis):
    pad = target - x.shape[axis]
    if pad == 0:
        return x
    widths = [(0, 0)] * x.ndim
    widths[axis] = (0, pad)
    return jnp.pad(x, widths)


def prepare_folded_params(w_enc, b_enc, w_agg, b_agg, num_frames,
                          weight_dtype=jnp.bfloat16):
    """Fold both linears, both biases and the 1/F scale; pad lane-dense.

    Run ONCE at model-init time (not per forward call).
      w_enc: (P, D), b_enc: (D,), w_agg: (D, D), b_agg: (D,)   all float32
    Returns (w_fold_p (Pp,Dp) weight_dtype, b_fold_p (1,Dp) f32, D).
    """
    P, D = w_enc.shape
    P_pad = _round_up(P, LANE)
    D_pad = _round_up(D, LANE)

    # (W_enc @ W_agg) / F  and  b_enc @ W_agg + b_agg   -- all in f32.
    w_fold = (w_enc @ w_agg) * (1.0 / num_frames)                   # (P, D)
    b_fold = (b_enc @ w_agg + b_agg).reshape(1, D)                  # (1, D)

    w_fold_p = _pad_axis(_pad_axis(w_fold, P_pad, 0), D_pad, 1).astype(weight_dtype)
    b_fold_p = _pad_axis(b_fold, D_pad, 1).astype(jnp.float32)
    return w_fold_p, b_fold_p, D


def video_clip_forward(video_frames, w_fold_p, b_fold_p, out_dim):
    """video_frames: (F, C, H, W) float32. Returns (1, out_dim) float32."""
    F, C, H, W = video_frames.shape
    P = C * H * W
    P_pad, D_pad = w_fold_p.shape

    # Per-call work: only pad the activations (weights were padded at init).
    x = _pad_axis(video_frames.reshape(F, P).astype(jnp.float32), P_pad, 1)

    flops = F * P_pad + 2 * P_pad * D_pad + D_pad
    bytes_accessed = (4 * F * P_pad                     # x (f32)
                      + 2 * P_pad * D_pad               # W_fold (bf16)
                      + 4 * D_pad                       # b_fold (f32)
                      + 4 * D_pad)                      # out (f32)

    out_padded = pl.pallas_call(
        videoclip_kernel,
        out_shape=jax.ShapeDtypeStruct((1, D_pad), jnp.float32),
        in_specs=[
            pl.BlockSpec(memory_space=pltpu.MemorySpace.VMEM),  # x
            pl.BlockSpec(memory_space=pltpu.MemorySpace.VMEM),  # w_fold
            pl.BlockSpec(memory_space=pltpu.MemorySpace.VMEM),  # b_fold
        ],
        out_specs=pl.BlockSpec(memory_space=pltpu.MemorySpace.VMEM),
        compiler_params=pltpu.CompilerParams(
            # Fine for toy shapes on v5e/v6e/v7x; the future K-tiled version
            # should raise this (<= ~48-56 MiB on v7x, 64-100 MiB on v5e/v6e).
            vmem_limit_bytes=32 * 1024 * 1024),
        cost_estimate=pl.CostEstimate(
            flops=flops, transcendentals=0, bytes_accessed=bytes_accessed),
    )(x, w_fold_p, b_fold_p)

    # Slice the lane padding back off (glue, outside the kernel).
    return out_padded[:, :out_dim]


def reference_forward(video_frames, w_enc, b_enc, w_agg, b_agg):
    """Pure-JAX f32 reference mirroring the PyTorch per-frame loop exactly."""
    F = video_frames.shape[0]
    embs = []
    for f in range(F):
        frame = video_frames[f].reshape(1, -1)          # unsqueeze(0) + flatten
        embs.append(frame @ w_enc + b_enc[None, :])     # encode_image
    E = jnp.concatenate(embs, axis=0)                   # (F, D)
    mean_emb = jnp.mean(E, axis=0, keepdims=True)       # (1, D)
    return mean_emb @ w_agg + b_agg[None, :]            # frame_agg


if __name__ == "__main__":
    # Small shapes consistent with the module:
    #   num_frames F = 8, frame (C, H, W) = (4, 16, 16), output_dim D = 32
    F, C, H, W = 8, 4, 16, 16
    P = C * H * W
    D = 32

    key = jax.random.PRNGKey(0)
    k_x, k_we, k_be, k_wa, k_ba = jax.random.split(key, 5)

    video_frames = jax.random.normal(k_x, (F, C, H, W), dtype=jnp.float32)

    # Weights stored as (in, out) so the kernel computes x @ W directly
    # (transposed relative to PyTorch's (out, in) convention).
    w_enc = jax.random.normal(k_we, (P, D), dtype=jnp.float32) * (1.0 / P) ** 0.5
    b_enc = jax.random.normal(k_be, (D,), dtype=jnp.float32) * 0.01
    w_agg = jax.random.normal(k_wa, (D, D), dtype=jnp.float32) * (1.0 / D) ** 0.5
    b_agg = jax.random.normal(k_ba, (D,), dtype=jnp.float32) * 0.01

    # One-time "model init": fold + pad + cast weights (hoisted off the
    # per-call path).
    w_fold_p, b_fold_p, out_dim = prepare_folded_params(
        w_enc, b_enc, w_agg, b_agg, num_frames=F, weight_dtype=jnp.bfloat16)

    fwd = jax.jit(video_clip_forward, static_argnums=(3,))
    out = fwd(video_frames, w_fold_p, b_fold_p, out_dim)
    jax.block_until_ready(out)

    ref = reference_forward(video_frames, w_enc, b_enc, w_agg, b_agg)
    assert out.shape == (1, D), out.shape
    # bf16 weight streaming + fold changes accumulation; loosened tolerance.
    assert jnp.allclose(out, ref, atol=1e-2, rtol=1e-2), (out, ref)

    print("KERNEL_OK")
</pallas_src>

<mosaic_0001>
module attributes {stable_mosaic.version = 11 : i64} {
  func.func @videoclip_kernel(%arg0: memref<8x1024xf32, #tpu.memory_space<vmem>>, %arg1: memref<1024x128xbf16, #tpu.memory_space<vmem>>, %arg2: memref<1x128xf32, #tpu.memory_space<vmem>>, %arg3: memref<1x128xf32, #tpu.memory_space<vmem>>) attributes {dimension_semantics = [], scalar_prefetch = 0 : i64, scratch_operands = 0 : i64, tpu.core_type = #tpu.core_type<tc>} {
    %c0 = arith.constant 0 : index
    %c0_0 = arith.constant 0 : index
    %0 = vector.load %arg0[%c0, %c0_0] : memref<8x1024xf32, #tpu.memory_space<vmem>>, vector<8x1024xf32>
    %cst = arith.constant dense<0.000000e+00> : vector<1024xf32>
    %1 = vector.multi_reduction <add>, %0, %cst [0] : vector<8x1024xf32> to vector<1024xf32>
    %2 = vector.shape_cast %1 : vector<1024xf32> to vector<1x1024xf32>
    %3 = arith.truncf %2 : vector<1x1024xf32> to vector<1x1024xbf16>
    %c0_1 = arith.constant 0 : index
    %c0_2 = arith.constant 0 : index
    %4 = vector.load %arg1[%c0_1, %c0_2] : memref<1024x128xbf16, #tpu.memory_space<vmem>>, vector<1024x128xbf16>
    %cst_3 = arith.constant dense<0.000000e+00> : vector<1x128xf32>
    %5 = tpu.matmul %3, %4, %cst_3 {dimension_numbers = #tpu.dot_dimension_numbers<[1], [0], [0], [1], [0, 0, 1, 1], [], []>} : vector<1x1024xbf16>, vector<1024x128xbf16>, vector<1x128xf32> -> vector<1x128xf32>
    %c0_4 = arith.constant 0 : index
    %c0_5 = arith.constant 0 : index
    %6 = vector.load %arg2[%c0_4, %c0_5] : memref<1x128xf32, #tpu.memory_space<vmem>>, vector<1x128xf32>
    %7 = arith.addf %5, %6 : vector<1x128xf32>
    %c0_6 = arith.constant 0 : index
    %c0_7 = arith.constant 0 : index
    %8 = vector.load %arg3[%c0_6, %c0_7] : memref<1x128xf32, #tpu.memory_space<vmem>>, vector<1x128xf32>
    tpu.vector_store %arg3[%c0_6, %c0_7], %7 {strides = array<i32>} : memref<1x128xf32, #tpu.memory_space<vmem>>, vector<1x128xf32>,
    return
  }
}

</mosaic_0001>

<llo_original>
// kernel: video_clip_forward.1
$region0: #{video_clip_forward.1}
  #allocation0 [shape = 'u32[]', space=smem, size = 0x4, offset = 0x4, fixed_abs, tag = 'smem constant byte address 0x4 - core index']
  #allocation1 [shape = 'u32[72,128]{1,0:T(1,128)}', space=vmem, size = 0x9000, scoped, tag = 'internal scratch']
  %s0 = inlined_call_operand.vmem [shape: f32[8,1024], index: 0, kind: input, shape index: {}]
  %s1 = inlined_call_operand.vmem [shape: bf16[1024,128], index: 1, kind: input, shape index: {}]
  %s2 = inlined_call_operand.vmem [shape: f32[1,128], index: 2, kind: input, shape index: {}]
  %s3 = inlined_call_operand.hbm [shape: f32[1,128], index: 3, kind: output, shape index: {}]
  %s4 = sld [smem:[#allocation0]]
  $region22: #{video_clip_forward.1} parent=0
    _
  %s6 = ssub.s32 1, %s4
  %s7 = scalar_select 0, %s6, %s4
  $region1: #{video_clip_forward.1} parent=0
    #allocation2 [shape = 'u8[512]{0}', space=vmem, size = 0x400, scoped, tag = 'output window, operand 0, single buffered']
    #allocation3 [shape = 's32[1]{0}', space=sflag, size = 0x4, scoped, tag = 'scoped memory for video_clip_forward.1']
    %8 = vsyncpa [#allocation3], 0
    // Predicated region
    $region2: #{video_clip_forward.1} parent=1 // pred_check
      _
    $region3: #{video_clip_forward.1} parent=1 // pred_check_branch
      %10 = sbr.rel (0) target = $region5
    $region4: #{video_clip_forward.1} parent=1 // pred_region
      _
    $region5: #{video_clip_forward.1} parent=1 // pred_fallthru
      _
    // Predicated region
    $region6: #{video_clip_forward.1} parent=1 // pred_check
      _
    $region7: #{video_clip_forward.1} parent=1 // pred_check_branch
      %12 = sbr.rel (0) target = $region9
    $region8: #{video_clip_forward.1} parent=1 // pred_region
      _
    $region9: #{video_clip_forward.1} parent=1 // pred_fallthru
      _
    // Predicated region
    $region10: #{video_clip_forward.1} parent=1 // pred_check
      _
    $region11: #{video_clip_forward.1} parent=1 // pred_check_branch
      %14 = sbr.rel (0) target = $region13
    $region12: #{video_clip_forward.1} parent=1 // pred_region
      _
    $region13: #{video_clip_forward.1} parent=1 // pred_fallthru
      _
    %v15 = vld [vmem:[%s0] sm:$0xff]
    %v16 = vld [vmem:[%s0 + $0x8] sm:$0xff]
    %v17 = vld [vmem:[%s0 + $0x10] sm:$0xff]
    %v18 = vld [vmem:[%s0 + $0x18] sm:$0xff]
    %v19 = vld [vmem:[%s0 + $0x20] sm:$0xff]
    %v20 = vld [vmem:[%s0 + $0x28] sm:$0xff]
    %v21 = vld [vmem:[%s0 + $0x30] sm:$0xff]
    %v22 = vld [vmem:[%s0 + $0x38] sm:$0xff]
    %v23 = vrot.slane %v15, 4
    %v24 = vadd.f32 %v15, %v23
    %v25 = vrot.slane %v24, 2
    %v26 = vadd.f32 %v24, %v25
    %v27 = vrot.slane %v26, 1
    %v28 = vadd.f32 %v26, %v27
    %v29 = vrot.slane %v16, 4
    %v30 = vadd.f32 %v16, %v29
    %v31 = vrot.slane %v30, 2
    %v32 = vadd.f32 %v30, %v31
    %v33 = vrot.slane %v32, 1
    %v34 = vadd.f32 %v32, %v33
    %v35 = vrot.slane %v17, 4
    %v36 = vadd.f32 %v17, %v35
    %v37 = vrot.slane %v36, 2
    %v38 = vadd.f32 %v36, %v37
    %v39 = vrot.slane %v38, 1
    %v40 = vadd.f32 %v38, %v39
    %v41 = vrot.slane %v18, 4
    %v42 = vadd.f32 %v18, %v41
    %v43 = vrot.slane %v42, 2
    %v44 = vadd.f32 %v42, %v43
    %v45 = vrot.slane %v44, 1
    %v46 = vadd.f32 %v44, %v45
    %v47 = vrot.slane %v19, 4
    %v48 = vadd.f32 %v19, %v47
    %v49 = vrot.slane %v48, 2
    %v50 = vadd.f32 %v48, %v49
    %v51 = vrot.slane %v50, 1
    %v52 = vadd.f32 %v50, %v51
    %v53 = vrot.slane %v20, 4
    %v54 = vadd.f32 %v20, %v53
    %v55 = vrot.slane %v54, 2
    %v56 = vadd.f32 %v54, %v55
    %v57 = vrot.slane %v56, 1
    %v58 = vadd.f32 %v56, %v57
    %v59 = vrot.slane %v21, 4
    %v60 = vadd.f32 %v21, %v59
    %v61 = vrot.slane %v60, 2
    %v62 = vadd.f32 %v60, %v61
    %v63 = vrot.slane %v62, 1
    %v64 = vadd.f32 %v62, %v63
    %v65 = vrot.slane %v22, 4
    %v66 = vadd.f32 %v22, %v65
    %v67 = vrot.slane %v66, 2
    %v68 = vadd.f32 %v66, %v67
    %v69 = vrot.slane %v68, 1
    %v70 = vadd.f32 %v68, %v69
    %v71 = vpack.c.bf16 %v28, %v28
    %v72 = vpack.c.bf16 %v34, %v34
    %v73 = vpack.c.bf16 %v40, %v40
    %v74 = vpack.c.bf16 %v46, %v46
    %v75 = vpack.c.bf16 %v52, %v52
    %v76 = vpack.c.bf16 %v58, %v58
    %v77 = vpack.c.bf16 %v64, %v64
    %v78 = vpack.c.bf16 %v70, %v70
    %v79 = vld [vmem:[%s1] sm:$0xf]
    %v80 = vld [vmem:[%s1 + $0x4] sm:$0xf]
    %v81 = vld [vmem:[%s1 + $0x8] sm:$0xf]
    %v82 = vld [vmem:[%s1 + $0xc] sm:$0xf]
    %v83 = vld [vmem:[%s1 + $0x10] sm:$0xf]
    %v84 = vld [vmem:[%s1 + $0x14] sm:$0xf]
    %v85 = vld [vmem:[%s1 + $0x18] sm:$0xf]
    %v86 = vld [vmem:[%s1 + $0x1c] sm:$0xf]
    %v87 = vld [vmem:[%s1 + $0x20] sm:$0xf]
    %v88 = vld [vmem:[%s1 + $0x24] sm:$0xf]
    %v89 = vld [vmem:[%s1 + $0x28] sm:$0xf]
    %v90 = vld [vmem:[%s1 + $0x2c] sm:$0xf]
    %v91 = vld [vmem:[%s1 + $0x30] sm:$0xf]
    %v92 = vld [vmem:[%s1 + $0x34] sm:$0xf]
    %v93 = vld [vmem:[%s1 + $0x38] sm:$0xf]
    %v94 = vld [vmem:[%s1 + $0x3c] sm:$0xf]
    %v95 = vld [vmem:[%s1 + $0x40] sm:$0xf]
    %v96 = vld [vmem:[%s1 + $0x44] sm:$0xf]
    %v97 = vld [vmem:[%s1 + $0x48] sm:$0xf]
    %v98 = vld [vmem:[%s1 + $0x4c] sm:$0xf]
    %v99 = vld [vmem:[%s1 + $0x50] sm:$0xf]
    %v100 = vld [vmem:[%s1 + $0x54] sm:$0xf]
    %v101 = vld [vmem:[%s1 + $0x58] sm:$0xf]
    %v102 = vld [vmem:[%s1 + $0x5c] sm:$0xf]
    %v103 = vld [vmem:[%s1 + $0x60] sm:$0xf]
    %v104 = vld [vmem:[%s1 + $0x64] sm:$0xf]
    %v105 = vld [vmem:[%s1 + $0x68] sm:$0xf]
    %v106 = vld [vmem:[%s1 + $0x6c] sm:$0xf]
    %v107 = vld [vmem:[%s1 + $0x70] sm:$0xf]
    %v108 = vld [vmem:[%s1 + $0x74] sm:$0xf]
    %v109 = vld [vmem:[%s1 + $0x78] sm:$0xf]
    %v110 = vld [vmem:[%s1 + $0x7c] sm:$0xf]
    %v111 = vld [vmem:[%s1 + $0x80] sm:$0xf]
    %v112 = vld [vmem:[%s1 + $0x84] sm:$0xf]
    %v113 = vld [vmem:[%s1 + $0x88] sm:$0xf]
    %v114 = vld [vmem:[%s1 + $0x8c] sm:$0xf]
    %v115 = vld [vmem:[%s1 + $0x90] sm:$0xf]
    %v116 = vld [vmem:[%s1 + $0x94] sm:$0xf]
    %v117 = vld [vmem:[%s1 + $0x98] sm:$0xf]
    %v118 = vld [vmem:[%s1 + $0x9c] sm:$0xf]
    %v119 = vld [vmem:[%s1 + $0xa0] sm:$0xf]
    %v120 = vld [vmem:[%s1 + $0xa4] sm:$0xf]
    %v121 = vld [vmem:[%s1 + $0xa8] sm:$0xf]
    %v122 = vld [vmem:[%s1 + $0xac] sm:$0xf]
    %v123 = vld [vmem:[%s1 + $0xb0] sm:$0xf]
    %v124 = vld [vmem:[%s1 + $0xb4] sm:$0xf]
    %v125 = vld [vmem:[%s1 + $0xb8] sm:$0xf]
    %v126 = vld [vmem:[%s1 + $0xbc] sm:$0xf]
    %v127 = vld [vmem:[%s1 + $0xc0] sm:$0xf]
    %v128 = vld [vmem:[%s1 + $0xc4] sm:$0xf]
    %v129 = vld [vmem:[%s1 + $0xc8] sm:$0xf]
    %v130 = vld [vmem:[%s1 + $0xcc] sm:$0xf]
    %v131 = vld [vmem:[%s1 + $0xd0] sm:$0xf]
    %v132 = vld [vmem:[%s1 + $0xd4] sm:$0xf]
    %v133 = vld [vmem:[%s1 + $0xd8] sm:$0xf]
    %v134 = vld [vmem:[%s1 + $0xdc] sm:$0xf]
    %v135 = vld [vmem:[%s1 + $0xe0] sm:$0xf]
    %v136 = vld [vmem:[%s1 + $0xe4] sm:$0xf]
    %v137 = vld [vmem:[%s1 + $0xe8] sm:$0xf]
    %v138 = vld [vmem:[%s1 + $0xec] sm:$0xf]
    %v139 = vld [vmem:[%s1 + $0xf0] sm:$0xf]
    %v140 = vld [vmem:[%s1 + $0xf4] sm:$0xf]
    %v141 = vld [vmem:[%s1 + $0xf8] sm:$0xf]
    %v142 = vld [vmem:[%s1 + $0xfc] sm:$0xf]
    %v143 = vld [vmem:[%s1 + $0x100] sm:$0xf]
    %v144 = vld [vmem:[%s1 + $0x104] sm:$0xf]
    %v145 = vld [vmem:[%s1 + $0x108] sm:$0xf]
    %v146 = vld [vmem:[%s1 + $0x10c] sm:$0xf]
    %v147 = vld [vmem:[%s1 + $0x110] sm:$0xf]
    %v148 = vld [vmem:[%s1 + $0x114] sm:$0xf]
    %v149 = vld [vmem:[%s1 + $0x118] sm:$0xf]
    %v150 = vld [vmem:[%s1 + $0x11c] sm:$0xf]
    %v151 = vld [vmem:[%s1 + $0x120] sm:$0xf]
    %v152 = vld [vmem:[%s1 + $0x124] sm:$0xf]
    %v153 = vld [vmem:[%s1 + $0x128] sm:$0xf]
    %v154 = vld [vmem:[%s1 + $0x12c] sm:$0xf]
    %v155 = vld [vmem:[%s1 + $0x130] sm:$0xf]
    %v156 = vld [vmem:[%s1 + $0x134] sm:$0xf]
    %v157 = vld [vmem:[%s1 + $0x138] sm:$0xf]
    %v158 = vld [vmem:[%s1 + $0x13c] sm:$0xf]
    %v159 = vld [vmem:[%s1 + $0x140] sm:$0xf]
    %v160 = vld [vmem:[%s1 + $0x144] sm:$0xf]
    %v161 = vld [vmem:[%s1 + $0x148] sm:$0xf]
    %v162 = vld [vmem:[%s1 + $0x14c] sm:$0xf]
    %v163 = vld [vmem:[%s1 + $0x150] sm:$0xf]
    %v164 = vld [vmem:[%s1 + $0x154] sm:$0xf]
    %v165 = vld [vmem:[%s1 + $0x158] sm:$0xf]
    %v166 = vld [vmem:[%s1 + $0x15c] sm:$0xf]
    %v167 = vld [vmem:[%s1 + $0x160] sm:$0xf]
    %v168 = vld [vmem:[%s1 + $0x164] sm:$0xf]
    %v169 = vld [vmem:[%s1 + $0x168] sm:$0xf]
    %v170 = vld [vmem:[%s1 + $0x16c] sm:$0xf]
    %v171 = vld [vmem:[%s1 + $0x170] sm:$0xf]
    %v172 = vld [vmem:[%s1 + $0x174] sm:$0xf]
    %v173 = vld [vmem:[%s1 + $0x178] sm:$0xf]
    %v174 = vld [vmem:[%s1 + $0x17c] sm:$0xf]
    %v175 = vld [vmem:[%s1 + $0x180] sm:$0xf]
    %v176 = vld [vmem:[%s1 + $0x184] sm:$0xf]
    %v177 = vld [vmem:[%s1 + $0x188] sm:$0xf]
    %v178 = vld [vmem:[%s1 + $0x18c] sm:$0xf]
    %v179 = vld [vmem:[%s1 + $0x190] sm:$0xf]
    %v180 = vld [vmem:[%s1 + $0x194] sm:$0xf]
    %v181 = vld [vmem:[%s1 + $0x198] sm:$0xf]
    %v182 = vld [vmem:[%s1 + $0x19c] sm:$0xf]
    %v183 = vld [vmem:[%s1 + $0x1a0] sm:$0xf]
    %v184 = vld [vmem:[%s1 + $0x1a4] sm:$0xf]
    %v185 = vld [vmem:[%s1 + $0x1a8] sm:$0xf]
    %v186 = vld [vmem:[%s1 + $0x1ac] sm:$0xf]
    %v187 = vld [vmem:[%s1 + $0x1b0] sm:$0xf]
    %v188 = vld [vmem:[%s1 + $0x1b4] sm:$0xf]
    %v189 = vld [vmem:[%s1 + $0x1b8] sm:$0xf]
    %v190 = vld [vmem:[%s1 + $0x1bc] sm:$0xf]
    %v191 = vld [vmem:[%s1 + $0x1c0] sm:$0xf]
    %v192 = vld [vmem:[%s1 + $0x1c4] sm:$0xf]
    %v193 = vld [vmem:[%s1 + $0x1c8] sm:$0xf]
    %v194 = vld [vmem:[%s1 + $0x1cc] sm:$0xf]
    %v195 = vld [vmem:[%s1 + $0x1d0] sm:$0xf]
    %v196 = vld [vmem:[%s1 + $0x1d4] sm:$0xf]
    %v197 = vld [vmem:[%s1 + $0x1d8] sm:$0xf]
    %v198 = vld [vmem:[%s1 + $0x1dc] sm:$0xf]
    %v199 = vld [vmem:[%s1 + $0x1e0] sm:$0xf]
    %v200 = vld [vmem:[%s1 + $0x1e4] sm:$0xf]
    %v201 = vld [vmem:[%s1 + $0x1e8] sm:$0xf]
    %v202 = vld [vmem:[%s1 + $0x1ec] sm:$0xf]
    %v203 = vld [vmem:[%s1 + $0x1f0] sm:$0xf]
    %v204 = vld [vmem:[%s1 + $0x1f4] sm:$0xf]
    %v205 = vld [vmem:[%s1 + $0x1f8] sm:$0xf]
    %v206 = vld [vmem:[%s1 + $0x1fc] sm:$0xf]
    %v207 = vld [vmem:[%s2] sm:$0x1]
    %v336 = vunpack.c.l.b16 %v79
    %v337 = vunpack.c.l.b16 %v80
    %v338 = vunpack.c.l.b16 %v81
    %v339 = vunpack.c.l.b16 %v82
    %v340 = vunpack.c.l.b16 %v83
    %v341 = vunpack.c.l.b16 %v84
    %v342 = vunpack.c.l.b16 %v85
    %v343 = vunpack.c.l.b16 %v86
    %v344 = vunpack.c.l.b16 %v87
    %v345 = vunpack.c.l.b16 %v88
    %v346 = vunpack.c.l.b16 %v89
    %v347 = vunpack.c.l.b16 %v90
    %v348 = vunpack.c.l.b16 %v91
    %v349 = vunpack.c.l.b16 %v92
    %v350 = vunpack.c.l.b16 %v93
    %v351 = vunpack.c.l.b16 %v94
    %v352 = vunpack.c.l.b16 %v95
    %v353 = vunpack.c.l.b16 %v96
    %v354 = vunpack.c.l.b16 %v97
    %v355 = vunpack.c.l.b16 %v98
    %v356 = vunpack.c.l.b16 %v99
    %v357 = vunpack.c.l.b16 %v100
    %v358 = vunpack.c.l.b16 %v101
    %v359 = vunpack.c.l.b16 %v102
    %v360 = vunpack.c.l.b16 %v103
    %v361 = vunpack.c.l.b16 %v104
    %v362 = vunpack.c.l.b16 %v105
    %v363 = vunpack.c.l.b16 %v106
    %v364 = vunpack.c.l.b16 %v107
    %v365 = vunpack.c.l.b16 %v108
    %v366 = vunpack.c.l.b16 %v109
    %v367 = vunpack.c.l.b16 %v110
    %v368 = vunpack.c.l.b16 %v111
    %v369 = vunpack.c.l.b16 %v112
    %v370 = vunpack.c.l.b16 %v113
    %v371 = vunpack.c.l.b16 %v114
    %v372 = vunpack.c.l.b16 %v115
    %v373 = vunpack.c.l.b16 %v116
    %v374 = vunpack.c.l.b16 %v117
    %v375 = vunpack.c.l.b16 %v118
    %v376 = vunpack.c.l.b16 %v119
    %v377 = vunpack.c.l.b16 %v120
    %v378 = vunpack.c.l.b16 %v121
    %v379 = vunpack.c.l.b16 %v122
    %v380 = vunpack.c.l.b16 %v123
    %v381 = vunpack.c.l.b16 %v124
    %v382 = vunpack.c.l.b16 %v125
    %v383 = vunpack.c.l.b16 %v126
    %v384 = vunpack.c.l.b16 %v127
    %v385 = vunpack.c.l.b16 %v128
    %v386 = vunpack.c.l.b16 %v129
    %v387 = vunpack.c.l.b16 %v130
    %v388 = vunpack.c.l.b16 %v131
    %v389 = vunpack.c.l.b16 %v132
    %v390 = vunpack.c.l.b16 %v133
    %v391 = vunpack.c.l.b16 %v134
    %v392 = vunpack.c.l.b16 %v135
    %v393 = vunpack.c.l.b16 %v136
    %v394 = vunpack.c.l.b16 %v137
    %v395 = vunpack.c.l.b16 %v138
    %v396 = vunpack.c.l.b16 %v139
    %v397 = vunpack.c.l.b16 %v140
    %v398 = vunpack.c.l.b16 %v141
    %v399 = vunpack.c.l.b16 %v142
    %v400 = vunpack.c.l.b16 %v143
    %v401 = vunpack.c.l.b16 %v144
    %v402 = vunpack.c.l.b16 %v145
    %v403 = vunpack.c.l.b16 %v146
    %v404 = vunpack.c.l.b16 %v147
    %v405 = vunpack.c.l.b16 %v148
    %v406 = vunpack.c.l.b16 %v149
    %v407 = vunpack.c.l.b16 %v150
    %v408 = vunpack.c.l.b16 %v151
    %v409 = vunpack.c.l.b16 %v152
    %v410 = vunpack.c.l.b16 %v153
    %v411 = vunpack.c.l.b16 %v154
    %v412 = vunpack.c.l.b16 %v155
    %v413 = vunpack.c.l.b16 %v156
    %v414 = vunpack.c.l.b16 %v157
    %v415 = vunpack.c.l.b16 %v158
    %v416 = vunpack.c.l.b16 %v159
    %v417 = vunpack.c.l.b16 %v160
    %v418 = vunpack.c.l.b16 %v161
    %v419 = vunpack.c.l.b16 %v162
    %v420 = vunpack.c.l.b16 %v163
    %v421 = vunpack.c.l.b16 %v164
    %v422 = vunpack.c.l.b16 %v165
    %v423 = vunpack.c.l.b16 %v166
    %v424 = vunpack.c.l.b16 %v167
    %v425 = vunpack.c.l.b16 %v168
    %v426 = vunpack.c.l.b16 %v169
    %v427 = vunpack.c.l.b16 %v170
    %v428 = vunpack.c.l.b16 %v171
    %v429 = vunpack.c.l.b16 %v172
    %v430 = vunpack.c.l.b16 %v173
    %v431 = vunpack.c.l.b16 %v174
    %v432 = vunpack.c.l.b16 %v175
    %v433 = vunpack.c.l.b16 %v176
    %v434 = vunpack.c.l.b16 %v177
    %v435 = vunpack.c.l.b16 %v178
    %v436 = vunpack.c.l.b16 %v179
    %v437 = vunpack.c.l.b16 %v180
    %v438 = vunpack.c.l.b16 %v181
    %v439 = vunpack.c.l.b16 %v182
    %v440 = vunpack.c.l.b16 %v183
    %v441 = vunpack.c.l.b16 %v184
    %v442 = vunpack.c.l.b16 %v185
    %v443 = vunpack.c.l.b16 %v186
    %v444 = vunpack.c.l.b16 %v187
    %v445 = vunpack.c.l.b16 %v188
    %v446 = vunpack.c.l.b16 %v189
    %v447 = vunpack.c.l.b16 %v190
    %v448 = vunpack.c.l.b16 %v191
    %v449 = vunpack.c.l.b16 %v192
    %v450 = vunpack.c.l.b16 %v193
    %v451 = vunpack.c.l.b16 %v194
    %v452 = vunpack.c.l.b16 %v195
    %v453 = vunpack.c.l.b16 %v196
    %v454 = vunpack.c.l.b16 %v197
    %v455 = vunpack.c.l.b16 %v198
    %v456 = vunpack.c.l.b16 %v199
    %v457 = vunpack.c.l.b16 %v200
    %v458 = vunpack.c.l.b16 %v201
    %v459 = vunpack.c.l.b16 %v202
    %v460 = vunpack.c.l.b16 %v203
    %v461 = vunpack.c.l.b16 %v204
    %v462 = vunpack.c.l.b16 %v205
    %v463 = vunpack.c.l.b16 %v206
    %v464 = vpack.c.b16 %v337, %v336
    %v465 = vpack.c.b16 %v339, %v338
    %v466 = vpack.c.b16 %v341, %v340
    %v467 = vpack.c.b16 %v343, %v342
    %v468 = vpack.c.b16 %v345, %v344
    %v469 = vpack.c.b16 %v347, %v346
    %v470 = vpack.c.b16 %v349, %v348
    %v471 = vpack.c.b16 %v351, %v350
    %v472 = vpack.c.b16 %v353, %v352
    %v473 = vpack.c.b16 %v355, %v354
    %v474 = vpack.c.b16 %v357, %v356
    %v475 = vpack.c.b16 %v359, %v358
    %v476 = vpack.c.b16 %v361, %v360
    %v477 = vpack.c.b16 %v363, %v362
    %v478 = vpack.c.b16 %v365, %v364
    %v479 = vpack.c.b16 %v367, %v366
    %v480 = vpack.c.b16 %v369, %v368
    %v481 = vpack.c.b16 %v371, %v370
    %v482 = vpack.c.b16 %v373, %v372
    %v483 = vpack.c.b16 %v375, %v374
    %v484 = vpack.c.b16 %v377, %v376
    %v485 = vpack.c.b16 %v379, %v378
    %v486 = vpack.c.b16 %v381, %v380
    %v487 = vpack.c.b16 %v383, %v382
    %v488 = vpack.c.b16 %v385, %v384
    %v489 = vpack.c.b16 %v387, %v386
    %v490 = vpack.c.b16 %v389, %v388
    %v491 = vpack.c.b16 %v391, %v390
    %v492 = vpack.c.b16 %v393, %v392
    %v493 = vpack.c.b16 %v395, %v394
    %v494 = vpack.c.b16 %v397, %v396
    %v495 = vpack.c.b16 %v399, %v398
    %v496 = vpack.c.b16 %v401, %v400
    %v497 = vpack.c.b16 %v403, %v402
    %v498 = vpack.c.b16 %v405, %v404
    %v499 = vpack.c.b16 %v407, %v406
    %v500 = vpack.c.b16 %v409, %v408
    %v501 = vpack.c.b16 %v411, %v410
    %v502 = vpack.c.b16 %v413, %v412
    %v503 = vpack.c.b16 %v415, %v414
    %v504 = vpack.c.b16 %v417, %v416
    %v505 = vpack.c.b16 %v419, %v418
    %v506 = vpack.c.b16 %v421, %v420
    %v507 = vpack.c.b16 %v423, %v422
    %v508 = vpack.c.b16 %v425, %v424
    %v509 = vpack.c.b16 %v427, %v426
    %v510 = vpack.c.b16 %v429, %v428
    %v511 = vpack.c.b16 %v431, %v430
    %v512 = vpack.c.b16 %v433, %v432
    %v513 = vpack.c.b16 %v435, %v434
    %v514 = vpack.c.b16 %v437, %v436
    %v515 = vpack.c.b16 %v439, %v438
    %v516 = vpack.c.b16 %v441, %v440
    %v517 = vpack.c.b16 %v443, %v442
    %v518 = vpack.c.b16 %v445, %v444
    %v519 = vpack.c.b16 %v447, %v446
    %v520 = vpack.c.b16 %v449, %v448
    %v521 = vpack.c.b16 %v451, %v450
    %v522 = vpack.c.b16 %v453, %v452
    %v523 = vpack.c.b16 %v455, %v454
    %v524 = vpack.c.b16 %v457, %v456
    %v525 = vpack.c.b16 %v459, %v458
    %v526 = vpack.c.b16 %v461, %v460
    %v527 = vpack.c.b16 %v463, %v462
    %592 = vmatpush.bf16.msra.mxu0 %v471
    %593 = vmatpush.bf16.msra.mxu0 %v470
    %594 = vmatpush.bf16.msra.mxu0 %v469
    %595 = vmatpush.bf16.msra.mxu0 %v468
    %596 = vmatpush.bf16.msra.mxu0 %v467
    %597 = vmatpush.bf16.msra.mxu0 %v466
    %598 = vmatpush.bf16.msra.mxu0 %v465
    %599 = vmatpush.bf16.msra.mxu0 %v464
    %600 = vmatmul.bf16.gmra.mxu0 %v71
    %v601 = vpop.f32.mrf.mxu0
    %v602 = vadd.f32 %v207, %v601
    %v603 = vpop.f32.mrf.mxu0
    %604 = vdwg.mxu0
    %605 = vmatpush.bf16.msra.mxu0 %v479
    %606 = vmatpush.bf16.msra.mxu0 %v478
    %607 = vmatpush.bf16.msra.mxu0 %v477
    %608 = vmatpush.bf16.msra.mxu0 %v476
    %609 = vmatpush.bf16.msra.mxu0 %v475
    %610 = vmatpush.bf16.msra.mxu0 %v474
    %611 = vmatpush.bf16.msra.mxu0 %v473
    %612 = vmatpush.bf16.msra.mxu0 %v472
    %613 = vmatmul.bf16.gmra.mxu0 %v72
    %v614 = vpop.f32.mrf.mxu0
    %v615 = vadd.f32 %v602, %v614
    %v616 = vpop.f32.mrf.mxu0
    %617 = vdwg.mxu0
    %618 = vmatpush.bf16.msra.mxu0 %v487
    %619 = vmatpush.bf16.msra.mxu0 %v486
    %620 = vmatpush.bf16.msra.mxu0 %v485
    %621 = vmatpush.bf16.msra.mxu0 %v484
    %622 = vmatpush.bf16.msra.mxu0 %v483
    %623 = vmatpush.bf16.msra.mxu0 %v482
    %624 = vmatpush.bf16.msra.mxu0 %v481
    %625 = vmatpush.bf16.msra.mxu0 %v480
    %626 = vmatmul.bf16.gmra.mxu0 %v73
    %v627 = vpop.f32.mrf.mxu0
    %v628 = vadd.f32 %v615, %v627
    %v629 = vpop.f32.mrf.mxu0
    %630 = vdwg.mxu0
    %631 = vmatpush.bf16.msra.mxu0 %v495
    %632 = vmatpush.bf16.msra.mxu0 %v494
    %633 = vmatpush.bf16.msra.mxu0 %v493
    %634 = vmatpush.bf16.msra.mxu0 %v492
    %635 = vmatpush.bf16.msra.mxu0 %v491
    %636 = vmatpush.bf16.msra.mxu0 %v490
    %637 = vmatpush.bf16.msra.mxu0 %v489
    %638 = vmatpush.bf16.msra.mxu0 %v488
    %639 = vmatmul.bf16.gmra.mxu0 %v74
    %v640 = vpop.f32.mrf.mxu0
    %v641 = vadd.f32 %v628, %v640
    %v642 = vpop.f32.mrf.mxu0
    %643 = vdwg.mxu0
    %644 = vmatpush.bf16.msra.mxu0 %v503
    %645 = vmatpush.bf16.msra.mxu0 %v502
    %646 = vmatpush.bf16.msra.mxu0 %v501
    %647 = vmatpush.bf16.msra.mxu0 %v500
    %648 = vmatpush.bf16.msra.mxu0 %v499
    %649 = vmatpush.bf16.msra.mxu0 %v498
    %650 = vmatpush.bf16.msra.mxu0 %v497
    %651 = vmatpush.bf16.msra.mxu0 %v496
    %652 = vmatmul.bf16.gmra.mxu0 %v75
    %v653 = vpop.f32.mrf.mxu0
    %v654 = vadd.f32 %v641, %v653
    %v655 = vpop.f32.mrf.mxu0
    %656 = vdwg.mxu0
    %657 = vmatpush.bf16.msra.mxu0 %v511
    %658 = vmatpush.bf16.msra.mxu0 %v510
    %659 = vmatpush.bf16.msra.mxu0 %v509
    %660 = vmatpush.bf16.msra.mxu0 %v508
    %661 = vmatpush.bf16.msra.mxu0 %v507
    %662 = vmatpush.bf16.msra.mxu0 %v506
    %663 = vmatpush.bf16.msra.mxu0 %v505
    %664 = vmatpush.bf16.msra.mxu0 %v504
    %665 = vmatmul.bf16.gmra.mxu0 %v76
    %v666 = vpop.f32.mrf.mxu0
    %v667 = vadd.f32 %v654, %v666
    %v668 = vpop.f32.mrf.mxu0
    %669 = vdwg.mxu0
    %670 = vmatpush.bf16.msra.mxu0 %v519
    %671 = vmatpush.bf16.msra.mxu0 %v518
    %672 = vmatpush.bf16.msra.mxu0 %v517
    %673 = vmatpush.bf16.msra.mxu0 %v516
    %674 = vmatpush.bf16.msra.mxu0 %v515
    %675 = vmatpush.bf16.msra.mxu0 %v514
    %676 = vmatpush.bf16.msra.mxu0 %v513
    %677 = vmatpush.bf16.msra.mxu0 %v512
    %678 = vmatmul.bf16.gmra.mxu0 %v77
    %v679 = vpop.f32.mrf.mxu0
    %v680 = vadd.f32 %v667, %v679
    %v681 = vpop.f32.mrf.mxu0
    %682 = vdwg.mxu0
    %683 = vmatpush.bf16.msra.mxu0 %v527
    %684 = vmatpush.bf16.msra.mxu0 %v526
    %685 = vmatpush.bf16.msra.mxu0 %v525
    %686 = vmatpush.bf16.msra.mxu0 %v524
    %687 = vmatpush.bf16.msra.mxu0 %v523
    %688 = vmatpush.bf16.msra.mxu0 %v522
    %689 = vmatpush.bf16.msra.mxu0 %v521
    %690 = vmatpush.bf16.msra.mxu0 %v520
    %691 = vmatmul.bf16.gmra.mxu0 %v78
    %v692 = vpop.f32.mrf.mxu0
    %v693 = vadd.f32 %v680, %v692
    %v694 = vpop.f32.mrf.mxu0
    %695 = vdwg.mxu0
    %696 = vst [vmem:[#allocation2] sm:$0x1] %v693
    // Predicated region
    $region14: #{video_clip_forward.1} parent=1 // pred_check
      _
    $region15: #{video_clip_forward.1} parent=1 // pred_check_branch
      %698 = sbr.rel (0) target = $region17
    $region16: #{video_clip_forward.1} parent=1 // pred_region
      %700 = vsyncadd [#allocation3], 0
      %s702 = sshll.u32 [#allocation2], 4
      %s703 = int_to_ptr.vmem [resolvable:$true] %s702
      %s704 = sshll.u32 %s3, 4
      %s705 = int_to_ptr.hbm [resolvable:$true] %s704
      %707 = dma.vmem_to_hbm [thread:$0]  %s703, 16, %s705, [#allocation3]
    $region17: #{video_clip_forward.1} parent=1 // pred_fallthru
      _
    // Predicated region
    $region18: #{video_clip_forward.1} parent=1 // pred_check
      _
    $region19: #{video_clip_forward.1} parent=1 // pred_check_branch
      %709 = sbr.rel (0) target = $region21
    $region20: #{video_clip_forward.1} parent=1 // pred_region
      %711 = dma.done [#allocation3], 16
    $region21: #{video_clip_forward.1} parent=1 // pred_fallthru
      _
    %712 = vsyncpa [#allocation3], 1

</llo_original>
